<compile_context>
chip_gen: v6e
topology: v6e:2x2x1
jax: 0.10.0
libtpu: 0.0.40
codegen_flags: <defaults>
</compile_context>

<pallas_src>
import functools

import jax
import jax.numpy as jnp
from jax.experimental import pallas as pl
from jax.experimental.pallas import tpu as pltpu

LANE = 128


def lstm_decoder_kernel(*refs, n_layers, hid_dim):
    if n_layers > 1:
        (x_ref, enc_ref, h0_ref, c0_ref, w0_ref, wn_ref, b_ref, fcw_ref, fcb_ref,
         pred_ref, h_ref, c_ref) = refs
    else:
        (x_ref, enc_ref, h0_ref, c0_ref, w0_ref, b_ref, fcw_ref, fcb_ref,
         pred_ref, h_ref, c_ref) = refs
        wn_ref = None

    H = hid_dim
    L = n_layers
    t = pl.program_id(0)

    # NOTE: self.dropout(input.float()) in the PyTorch forward discards its result
    # (and nn.Dropout is identity in eval mode) -> no-op here.

    # Load the initial recurrent state into the VMEM-resident output slabs once.
    @pl.when(t == 0)
    def _():
        h_ref[...] = h0_ref[...]
        c_ref[...] = c0_ref[...]

    x = x_ref[...]                           # (B, O)    f32
    enc = enc_ref[...]                       # (B, S, H) f32, resident across t
    h_all = h_ref[...]                       # (B, L*H)  f32
    c_all = c_ref[...]                       # (B, L*H)  f32
    h_top = h_all[:, (L - 1) * H:L * H]      # (B, H) == hidden[-1]

    # ---- Attention ----------------------------------------------------------
    # scores = bmm(enc (B,S,H), h_top (B,H,1)) -> (B,S); softmax over S
    scores = jnp.sum(enc * h_top[:, None, :], axis=-1)            # (B, S)
    m = jnp.max(scores, axis=-1, keepdims=True)
    e = jnp.exp(scores - m)
    denom = jnp.sum(e, axis=-1, keepdims=True)
    attn = e * pl.reciprocal(denom, approx=True)                  # EUP, off the VPU
    # context = bmm(attn (B,1,S), enc (B,S,H)) -> (B, H)
    ctx = jnp.sum(attn[:, :, None] * enc, axis=1)                 # (B, H)

    # ---- Multi-layer LSTM, single time step (one fused bf16 matmul per layer)
    h_parts, c_parts = [], []
    h_prev = None
    for l in range(L):                       # static Python loop; L is small
        h_l = h_all[:, l * H:(l + 1) * H]
        c_l = c_all[:, l * H:(l + 1) * H]
        if l == 0:
            # rnn_input = cat([input, context]); stacked with h_l for one matmul
            act = jnp.concatenate([x, ctx, h_l], axis=-1)          # (B, O+2H)
            w = w0_ref[...]                                        # (O+2H, 4H) bf16
        else:
            act = jnp.concatenate([h_prev, h_l], axis=-1)          # (B, 2H)
            w = wn_ref[l - 1]                                      # (2H, 4H)   bf16
        gates = jnp.dot(act.astype(jnp.bfloat16), w,
                        preferred_element_type=jnp.float32) + b_ref[l]

        # PyTorch gate order: i, f, g, o.  Gate elementwise math stays f32 (v5e-safe).
        i = jax.nn.sigmoid(gates[:, 0 * H:1 * H])
        f = jax.nn.sigmoid(gates[:, 1 * H:2 * H])
        g = jnp.tanh(gates[:, 2 * H:3 * H])
        o = jax.nn.sigmoid(gates[:, 3 * H:4 * H])

        c_new = f * c_l + i * g
        h_new = o * jnp.tanh(c_new)
        h_parts.append(h_new)
        c_parts.append(c_new)
        h_prev = h_new
        # nn.LSTM inter-layer dropout is training-only; inference = identity.

    # Single full-width store per state slab per token (one (8,128) tile each).
    h_ref[...] = jnp.concatenate(h_parts, axis=-1)
    c_ref[...] = jnp.concatenate(c_parts, axis=-1)

    # ---- fc_out (lane-dense padded output) ----------------------------------
    pred_ref[...] = (
        jnp.dot(h_prev.astype(jnp.bfloat16), fcw_ref[...],
                preferred_element_type=jnp.float32)
        + fcb_ref[...]
    )


# ------------------------------- wrappers -------------------------------------

def prepare_encoder_outputs(encoder_outputs_sbh):
    """(S,B,H) -> (B,S,H) f32.  Do this ONCE per sequence, outside the decode loop."""
    return jnp.transpose(encoder_outputs_sbh, (1, 0, 2)).astype(jnp.float32)


def lstm_decoder_decode(xs_tbo, enc_bsh, hidden_lbh, cell_lbh, packed_params, out_dim):
    """Teacher-forced decode of T tokens in ONE pallas_call (grid=(T,)).

    xs_tbo      : (T, B, O) per-token decoder inputs
    enc_bsh     : (B, S, H) prepared encoder outputs (prepare_encoder_outputs)
    hidden/cell : (L, B, H) initial LSTM state (PyTorch layout)
    returns (preds (T, B, out_dim), hidden' (L,B,H), cell' (L,B,H))
    """
    w0, wn, b, fcw, fcb = packed_params
    T, B, O = xs_tbo.shape
    _, S, H = enc_bsh.shape
    L = hidden_lbh.shape[0]
    o_pad = fcw.shape[1]

    # (L,B,H) -> (B, L*H): all recurrent state in one vreg tile.
    h0 = jnp.transpose(hidden_lbh, (1, 0, 2)).reshape(B, L * H).astype(jnp.float32)
    c0 = jnp.transpose(cell_lbh, (1, 0, 2)).reshape(B, L * H).astype(jnp.float32)

    def const_spec(shape):
        return pl.BlockSpec(shape, lambda *_: (0,) * len(shape))

    in_specs = [
        pl.BlockSpec((None, B, O), lambda t: (t, 0, 0)),   # x[t] streamed per token
        const_spec((B, S, H)),                             # enc   (resident)
        const_spec((B, L * H)),                            # h0
        const_spec((B, L * H)),                            # c0
        const_spec(w0.shape),                              # w0    (resident)
    ]
    args = [xs_tbo.astype(jnp.float32), enc_bsh, h0, c0, w0]
    if L > 1:
        in_specs.append(const_spec(wn.shape))              # wn    (resident)
        args.append(wn)
    in_specs += [const_spec(b.shape), const_spec(fcw.shape), const_spec(fcb.shape)]
    args += [b, fcw, fcb]

    kernel = functools.partial(lstm_decoder_kernel, n_layers=L, hid_dim=H)

    preds_pad, h_out, c_out = pl.pallas_call(
        kernel,
        grid=(T,),
        in_specs=in_specs,
        out_specs=[
            pl.BlockSpec((None, B, o_pad), lambda t: (t, 0, 0)),   # pred[t] per token
            const_spec((B, L * H)),                                # final hidden slab
            const_spec((B, L * H)),                                # final cell slab
        ],
        out_shape=(
            jax.ShapeDtypeStruct((T, B, o_pad), jnp.float32),
            jax.ShapeDtypeStruct((B, L * H), jnp.float32),
            jax.ShapeDtypeStruct((B, L * H), jnp.float32),
        ),
        compiler_params=pltpu.CompilerParams(dimension_semantics=("arbitrary",)),
    )(*args)

    hidden_new = h_out.reshape(B, L, H).transpose(1, 0, 2)
    cell_new = c_out.reshape(B, L, H).transpose(1, 0, 2)
    return preds_pad[:, :, :out_dim], hidden_new, cell_new


def lstm_decoder_forward(input_tbo, encoder_outputs_sbh, hidden, cell, packed_params, out_dim):
    """Exact mirror of LSTMDecoder.forward (single step; PyTorch layouts)."""
    enc_bsh = prepare_encoder_outputs(encoder_outputs_sbh)
    preds, h_new, c_new = lstm_decoder_decode(
        input_tbo.astype(jnp.float32), enc_bsh,
        hidden.astype(jnp.float32), cell.astype(jnp.float32),
        packed_params, out_dim)
    return preds[0], h_new, c_new


# --------------------------- parameter handling --------------------------------

def init_params(key, output_dim, hidden_dim, n_layers):
    """PyTorch-layout params, U(-1/sqrt(H), 1/sqrt(H)) like nn.LSTM / nn.Linear."""
    O, H, L = output_dim, hidden_dim, n_layers
    bound = 1.0 / float(H) ** 0.5
    keys = jax.random.split(key, 4 * L + 2)
    k = 0
    w_ih, w_hh, b_ih, b_hh = [], [], [], []
    for l in range(L):
        in_sz = (O + H) if l == 0 else H
        w_ih.append(jax.random.uniform(keys[k], (4 * H, in_sz), jnp.float32, -bound, bound)); k += 1
        w_hh.append(jax.random.uniform(keys[k], (4 * H, H), jnp.float32, -bound, bound)); k += 1
        b_ih.append(jax.random.uniform(keys[k], (4 * H,), jnp.float32, -bound, bound)); k += 1
        b_hh.append(jax.random.uniform(keys[k], (4 * H,), jnp.float32, -bound, bound)); k += 1
    fc_w = jax.random.uniform(keys[k], (O, H), jnp.float32, -bound, bound); k += 1
    fc_b = jax.random.uniform(keys[k], (O,), jnp.float32, -bound, bound)
    return (w_ih, w_hh, b_ih, b_hh, fc_w, fc_b)


def pack_params(torch_params, output_dim, hidden_dim, n_layers):
    """One-time host-side restacking into the kernel layout: fused-K weights (bf16),
    pre-summed f32 biases, lane-padded bf16 fc_out weight, f32 fc_out bias."""
    O, H, L = output_dim, hidden_dim, n_layers
    w_ih, w_hh, b_ih, b_hh, fc_w, fc_b = torch_params

    w0 = jnp.concatenate([w_ih[0].T, w_hh[0].T], axis=0).astype(jnp.bfloat16)     # (O+2H, 4H)
    if L > 1:
        wn = jnp.stack(
            [jnp.concatenate([w_ih[l].T, w_hh[l].T], axis=0) for l in range(1, L)]
        ).astype(jnp.bfloat16)                                                    # (L-1, 2H, 4H)
    else:
        wn = None   # no dummy operand / DMA in the single-layer config

    b = jnp.stack([(b_ih[l] + b_hh[l]).reshape(1, 4 * H) for l in range(L)]).astype(jnp.float32)

    o_pad = ((O + LANE - 1) // LANE) * LANE
    fcw = jnp.zeros((H, o_pad), jnp.float32).at[:, :O].set(fc_w.T).astype(jnp.bfloat16)
    fcb = jnp.zeros((1, o_pad), jnp.float32).at[:, :O].set(fc_b.reshape(1, O))
    return (w0, wn, b, fcw, fcb)


# ------------------------------ reference --------------------------------------

def reference_forward(input_tbo, enc_sbh, hidden, cell, torch_params):
    """Pure-jnp mirror of the PyTorch forward (one step), for validation."""
    w_ih, w_hh, b_ih, b_hh, fc_w, fc_b = torch_params
    L, _, H = hidden.shape
    enc = jnp.transpose(enc_sbh, (1, 0, 2))                       # (B, S, H)
    h_top = hidden[-1]
    scores = jnp.einsum("bsh,bh->bs", enc, h_top)
    attn = jax.nn.softmax(scores, axis=1)
    ctx = jnp.einsum("bs,bsh->bh", attn, enc)
    inp = jnp.concatenate([input_tbo[0], ctx], axis=-1)           # (B, O+H)
    h_out, c_out = [], []
    for l in range(L):
        gates = inp @ w_ih[l].T + hidden[l] @ w_hh[l].T + b_ih[l] + b_hh[l]
        i = jax.nn.sigmoid(gates[:, 0 * H:1 * H])
        f = jax.nn.sigmoid(gates[:, 1 * H:2 * H])
        g = jnp.tanh(gates[:, 2 * H:3 * H])
        o = jax.nn.sigmoid(gates[:, 3 * H:4 * H])
        c_new = f * cell[l] + i * g
        h_new = o * jnp.tanh(c_new)
        h_out.append(h_new); c_out.append(c_new)
        inp = h_new
    pred = inp @ fc_w.T + fc_b
    return pred, jnp.stack(h_out), jnp.stack(c_out)


def reference_decode(xs_tbo, enc_sbh, hidden, cell, torch_params):
    """Teacher-forced loop: one reference_forward per token."""
    preds = []
    for t in range(xs_tbo.shape[0]):
        pred, hidden, cell = reference_forward(xs_tbo[t:t + 1], enc_sbh, hidden, cell, torch_params)
        preds.append(pred)
    return jnp.stack(preds), hidden, cell


if __name__ == "__main__":
    # Shapes consistent with the module: output_dim=8, hidden_dim=32, n_layers=2,
    # batch=2, src_len=8, decode length T=4.
    O, H, L, B, S, T = 8, 32, 2, 2, 8, 4

    key = jax.random.PRNGKey(0)
    kp, kx, ke, kh, kc = jax.random.split(key, 5)

    torch_params = init_params(kp, O, H, L)
    packed = pack_params(torch_params, O, H, L)      # done once, outside the decode loop

    xs_tbo = jax.random.normal(kx, (T, B, O), jnp.float32)   # teacher-forced step inputs
    enc_sbh = jax.random.normal(ke, (S, B, H), jnp.float32)  # encoder outputs (S,B,H)
    hidden = jax.random.normal(kh, (L, B, H), jnp.float32)
    cell = jax.random.normal(kc, (L, B, H), jnp.float32)

    # Plain-JAX reference (loose tol: bf16 MXU operands in the kernel).
    preds_r, h_r, c_r = reference_decode(xs_tbo, enc_sbh, hidden, cell, torch_params)

    # Hoisted prepare (once per sequence) + ONE pallas_call for the whole T-token loop.
    enc_bsh = prepare_encoder_outputs(enc_sbh)
    preds, h_new, c_new = lstm_decoder_decode(xs_tbo, enc_bsh, hidden, cell, packed, O)
    jax.block_until_ready((preds, h_new, c_new))

    assert preds.shape == (T, B, O)
    assert h_new.shape == (L, B, H) and c_new.shape == (L, B, H)
    assert jnp.max(jnp.abs(preds - preds_r)) < 5e-2
    assert jnp.max(jnp.abs(h_new - h_r)) < 5e-2
    assert jnp.max(jnp.abs(c_new - c_r)) < 5e-2

    # Single-step path (T == 1) == LSTMDecoder.forward exactly.
    pred1_r, h1_r, c1_r = reference_forward(xs_tbo[:1], enc_sbh, hidden, cell, torch_params)
    pred1, h1, c1 = lstm_decoder_forward(xs_tbo[:1], enc_sbh, hidden, cell, packed, O)
    jax.block_until_ready((pred1, h1, c1))
    assert pred1.shape == (B, O)
    assert jnp.max(jnp.abs(pred1 - pred1_r)) < 5e-2
    assert jnp.max(jnp.abs(h1 - h1_r)) < 5e-2
    assert jnp.max(jnp.abs(c1 - c1_r)) < 5e-2

    print("KERNEL_OK")
</pallas_src>

<mosaic_0001>
module attributes {stable_mosaic.version = 11 : i64} {
  func.func @lstm_decoder_kernel(%arg0: i32, %arg1: memref<1x2x8xf32, #tpu.memory_space<vmem>>, %arg2: memref<2x8x32xf32, #tpu.memory_space<vmem>>, %arg3: memref<2x64xf32, #tpu.memory_space<vmem>>, %arg4: memref<2x64xf32, #tpu.memory_space<vmem>>, %arg5: memref<72x128xbf16, #tpu.memory_space<vmem>>, %arg6: memref<1x64x128xbf16, #tpu.memory_space<vmem>>, %arg7: memref<2x1x128xf32, #tpu.memory_space<vmem>>, %arg8: memref<32x128xbf16, #tpu.memory_space<vmem>>, %arg9: memref<1x128xf32, #tpu.memory_space<vmem>>, %arg10: memref<1x2x128xf32, #tpu.memory_space<vmem>>, %arg11: memref<2x64xf32, #tpu.memory_space<vmem>>, %arg12: memref<2x64xf32, #tpu.memory_space<vmem>>) attributes {dimension_semantics = [#tpu.dimension_semantics<arbitrary>], iteration_bounds = array<i64: 4>, scalar_prefetch = 0 : i64, scratch_operands = 0 : i64, tpu.core_type = #tpu.core_type<tc>, window_params = [{transform_indices = @transform_0, window_bounds = array<i64: 1, 2, 8>}, {pipeline_mode = #tpu.pipeline_mode<synchronous>, transform_indices = @transform_1, window_bounds = array<i64: 2, 8, 32>}, {pipeline_mode = #tpu.pipeline_mode<synchronous>, transform_indices = @transform_2, window_bounds = array<i64: 2, 64>}, {pipeline_mode = #tpu.pipeline_mode<synchronous>, transform_indices = @transform_3, window_bounds = array<i64: 2, 64>}, {pipeline_mode = #tpu.pipeline_mode<synchronous>, transform_indices = @transform_4, window_bounds = array<i64: 72, 128>}, {pipeline_mode = #tpu.pipeline_mode<synchronous>, transform_indices = @transform_5, window_bounds = array<i64: 1, 64, 128>}, {pipeline_mode = #tpu.pipeline_mode<synchronous>, transform_indices = @transform_6, window_bounds = array<i64: 2, 1, 128>}, {pipeline_mode = #tpu.pipeline_mode<synchronous>, transform_indices = @transform_7, window_bounds = array<i64: 32, 128>}, {pipeline_mode = #tpu.pipeline_mode<synchronous>, transform_indices = @transform_8, window_bounds = array<i64: 1, 128>}, {transform_indices = @transform_9, window_bounds = array<i64: 1, 2, 128>}, {pipeline_mode = #tpu.pipeline_mode<synchronous>, transform_indices = @transform_10, window_bounds = array<i64: 2, 64>}, {pipeline_mode = #tpu.pipeline_mode<synchronous>, transform_indices = @transform_11, window_bounds = array<i64: 2, 64>}]} {
    %c0_i32 = arith.constant 0 : i32
    %0 = arith.cmpi eq, %arg0, %c0_i32 : i32
    %1 = arith.extui %0 : i1 to i32
    %c0_i32_0 = arith.constant 0 : i32
    %2 = arith.cmpi ne, %1, %c0_i32_0 : i32
    scf.if %2 {
      %c0_43 = arith.constant 0 : index
      %c0_44 = arith.constant 0 : index
      %111 = vector.load %arg3[%c0_43, %c0_44] : memref<2x64xf32, #tpu.memory_space<vmem>>, vector<2x64xf32>
      %c0_45 = arith.constant 0 : index
      %c0_46 = arith.constant 0 : index
      %112 = vector.load %arg11[%c0_45, %c0_46] : memref<2x64xf32, #tpu.memory_space<vmem>>, vector<2x64xf32>
      tpu.vector_store %arg11[%c0_45, %c0_46], %111 {strides = array<i32>} : memref<2x64xf32, #tpu.memory_space<vmem>>, vector<2x64xf32>,
      %c0_47 = arith.constant 0 : index
      %c0_48 = arith.constant 0 : index
      %113 = vector.load %arg4[%c0_47, %c0_48] : memref<2x64xf32, #tpu.memory_space<vmem>>, vector<2x64xf32>
      %c0_49 = arith.constant 0 : index
      %c0_50 = arith.constant 0 : index
      %114 = vector.load %arg12[%c0_49, %c0_50] : memref<2x64xf32, #tpu.memory_space<vmem>>, vector<2x64xf32>
      tpu.vector_store %arg12[%c0_49, %c0_50], %113 {strides = array<i32>} : memref<2x64xf32, #tpu.memory_space<vmem>>, vector<2x64xf32>,
    } else {
    }
    %c0 = arith.constant 0 : index
    %c0_1 = arith.constant 0 : index
    %c0_2 = arith.constant 0 : index
    %3 = vector.load %arg1[%c0, %c0_1, %c0_2] : memref<1x2x8xf32, #tpu.memory_space<vmem>>, vector<1x2x8xf32>
    %4 = vector.shape_cast %3 : vector<1x2x8xf32> to vector<2x8xf32>
    %c0_3 = arith.constant 0 : index
    %c0_4 = arith.constant 0 : index
    %c0_5 = arith.constant 0 : index
    %5 = vector.load %arg2[%c0_3, %c0_4, %c0_5] : memref<2x8x32xf32, #tpu.memory_space<vmem>>, vector<2x8x32xf32>
    %c0_6 = arith.constant 0 : index
    %c0_7 = arith.constant 0 : index
    %6 = vector.load %arg11[%c0_6, %c0_7] : memref<2x64xf32, #tpu.memory_space<vmem>>, vector<2x64xf32>
    %c0_8 = arith.constant 0 : index
    %c0_9 = arith.constant 0 : index
    %7 = vector.load %arg12[%c0_8, %c0_9] : memref<2x64xf32, #tpu.memory_space<vmem>>, vector<2x64xf32>
    %8 = vector.extract_strided_slice %6 {offsets = [0, 32], sizes = [2, 32], strides = [1, 1]} : vector<2x64xf32> to vector<2x32xf32>
    %9 = vector.shape_cast %8 : vector<2x32xf32> to vector<2x1x32xf32>
    %10 = vector.broadcast %9 : vector<2x1x32xf32> to vector<2x8x32xf32>
    %11 = arith.mulf %5, %10 : vector<2x8x32xf32>
    %cst = arith.constant dense<0.000000e+00> : vector<2x8xf32>
    %12 = vector.multi_reduction <add>, %11, %cst [2] : vector<2x8x32xf32> to vector<2x8xf32>
    %cst_10 = arith.constant dense<0xFF800000> : vector<2xf32>
    %13 = vector.multi_reduction <maximumf>, %12, %cst_10 [1] : vector<2x8xf32> to vector<2xf32>
    %14 = vector.shape_cast %13 : vector<2xf32> to vector<2x1xf32>
    %15 = vector.broadcast %14 : vector<2x1xf32> to vector<2x8xf32>
    %16 = arith.subf %12, %15 : vector<2x8xf32>
    %17 = math.exp %16 : vector<2x8xf32>
    %cst_11 = arith.constant dense<0.000000e+00> : vector<2xf32>
    %18 = vector.multi_reduction <add>, %17, %cst_11 [1] : vector<2x8xf32> to vector<2xf32>
    %19 = vector.shape_cast %18 : vector<2xf32> to vector<2x1xf32>
    %20 = tpu.reciprocal %19 {approx = true} : vector<2x1xf32> -> vector<2x1xf32>
    %21 = vector.broadcast %20 : vector<2x1xf32> to vector<2x8xf32>
    %22 = arith.mulf %17, %21 : vector<2x8xf32>
    %23 = vector.shape_cast %22 : vector<2x8xf32> to vector<2x8x1xf32>
    %24 = vector.broadcast %23 : vector<2x8x1xf32> to vector<2x8x32xf32>
    %25 = arith.mulf %24, %5 : vector<2x8x32xf32>
    %cst_12 = arith.constant dense<0.000000e+00> : vector<2x32xf32>
    %26 = vector.multi_reduction <add>, %25, %cst_12 [1] : vector<2x8x32xf32> to vector<2x32xf32>
    %27 = vector.extract_strided_slice %6 {offsets = [0, 0], sizes = [2, 32], strides = [1, 1]} : vector<2x64xf32> to vector<2x32xf32>
    %28 = vector.extract_strided_slice %7 {offsets = [0, 0], sizes = [2, 32], strides = [1, 1]} : vector<2x64xf32> to vector<2x32xf32>
    %29 = tpu.concatenate %4, %26, %27 in 1 : vector<2x8xf32>, vector<2x32xf32>, vector<2x32xf32> -> vector<2x72xf32>
    %c0_13 = arith.constant 0 : index
    %c0_14 = arith.constant 0 : index
    %30 = vector.load %arg5[%c0_13, %c0_14] : memref<72x128xbf16, #tpu.memory_space<vmem>>, vector<72x128xbf16>
    %31 = arith.truncf %29 : vector<2x72xf32> to vector<2x72xbf16>
    %cst_15 = arith.constant dense<0.000000e+00> : vector<2x128xf32>
    %32 = tpu.matmul %31, %30, %cst_15 {dimension_numbers = #tpu.dot_dimension_numbers<[1], [0], [0], [1], [0, 0, 1, 1], [], []>} : vector<2x72xbf16>, vector<72x128xbf16>, vector<2x128xf32> -> vector<2x128xf32>
    %c0_16 = arith.constant 0 : index
    %c0_17 = arith.constant 0 : index
    %c0_18 = arith.constant 0 : index
    %33 = vector.load %arg7[%c0_16, %c0_17, %c0_18] : memref<2x1x128xf32, #tpu.memory_space<vmem>>, vector<1x1x128xf32>
    %34 = vector.shape_cast %33 : vector<1x1x128xf32> to vector<1x128xf32>
    %35 = vector.broadcast %34 : vector<1x128xf32> to vector<2x128xf32>
    %36 = arith.addf %32, %35 : vector<2x128xf32>
    %37 = vector.extract_strided_slice %36 {offsets = [0, 0], sizes = [2, 32], strides = [1, 1]} : vector<2x128xf32> to vector<2x32xf32>
    %38 = arith.negf %37 : vector<2x32xf32>
    %39 = math.exp %38 : vector<2x32xf32>
    %cst_19 = arith.constant 1.000000e+00 : f32
    %40 = vector.broadcast %cst_19 : f32 to vector<2x32xf32>
    %41 = arith.addf %40, %39 : vector<2x32xf32>
    %42 = arith.divf %40, %41 : vector<2x32xf32>
    %43 = vector.extract_strided_slice %36 {offsets = [0, 32], sizes = [2, 32], strides = [1, 1]} : vector<2x128xf32> to vector<2x32xf32>
    %44 = arith.negf %43 : vector<2x32xf32>
    %45 = math.exp %44 : vector<2x32xf32>
    %cst_20 = arith.constant 1.000000e+00 : f32
    %46 = vector.broadcast %cst_20 : f32 to vector<2x32xf32>
    %47 = arith.addf %46, %45 : vector<2x32xf32>
    %48 = arith.divf %46, %47 : vector<2x32xf32>
    %49 = vector.extract_strided_slice %36 {offsets = [0, 64], sizes = [2, 32], strides = [1, 1]} : vector<2x128xf32> to vector<2x32xf32>
    %50 = math.tanh %49 : vector<2x32xf32>
    %51 = vector.extract_strided_slice %36 {offsets = [0, 96], sizes = [2, 32], strides = [1, 1]} : vector<2x128xf32> to vector<2x32xf32>
    %52 = arith.negf %51 : vector<2x32xf32>
    %53 = math.exp %52 : vector<2x32xf32>
    %cst_21 = arith.constant 1.000000e+00 : f32
    %54 = vector.broadcast %cst_21 : f32 to vector<2x32xf32>
    %55 = arith.addf %54, %53 : vector<2x32xf32>
    %56 = arith.divf %54, %55 : vector<2x32xf32>
    %57 = arith.mulf %48, %28 : vector<2x32xf32>
    %58 = arith.mulf %42, %50 : vector<2x32xf32>
    %59 = arith.addf %57, %58 : vector<2x32xf32>
    %60 = math.tanh %59 : vector<2x32xf32>
    %61 = arith.mulf %56, %60 : vector<2x32xf32>
    %62 = vector.extract_strided_slice %6 {offsets = [0, 32], sizes = [2, 32], strides = [1, 1]} : vector<2x64xf32> to vector<2x32xf32>
    %63 = vector.extract_strided_slice %7 {offsets = [0, 32], sizes = [2, 32], strides = [1, 1]} : vector<2x64xf32> to vector<2x32xf32>
    %64 = tpu.concatenate %61, %62 in 1 : vector<2x32xf32>, vector<2x32xf32> -> vector<2x64xf32>
    %c0_22 = arith.constant 0 : index
    %c0_23 = arith.constant 0 : index
    %c0_24 = arith.constant 0 : index
    %65 = vector.load %arg6[%c0_22, %c0_23, %c0_24] : memref<1x64x128xbf16, #tpu.memory_space<vmem>>, vector<1x64x128xbf16>
    %66 = vector.shape_cast %65 : vector<1x64x128xbf16> to vector<64x128xbf16>
    %67 = arith.truncf %64 : vector<2x64xf32> to vector<2x64xbf16>
    %cst_25 = arith.constant dense<0.000000e+00> : vector<2x128xf32>
    %68 = tpu.matmul %67, %66, %cst_25 {dimension_numbers = #tpu.dot_dimension_numbers<[1], [0], [0], [1], [0, 0, 1, 1], [], []>} : vector<2x64xbf16>, vector<64x128xbf16>, vector<2x128xf32> -> vector<2x128xf32>
    %c1 = arith.constant 1 : index
    %c0_26 = arith.constant 0 : index
    %c0_27 = arith.constant 0 : index
    %69 = vector.load %arg7[%c1, %c0_26, %c0_27] : memref<2x1x128xf32, #tpu.memory_space<vmem>>, vector<1x1x128xf32>
    %70 = vector.shape_cast %69 : vector<1x1x128xf32> to vector<1x128xf32>
    %71 = vector.broadcast %70 : vector<1x128xf32> to vector<2x128xf32>
    %72 = arith.addf %68, %71 : vector<2x128xf32>
    %73 = vector.extract_strided_slice %72 {offsets = [0, 0], sizes = [2, 32], strides = [1, 1]} : vector<2x128xf32> to vector<2x32xf32>
    %74 = arith.negf %73 : vector<2x32xf32>
    %75 = math.exp %74 : vector<2x32xf32>
    %cst_28 = arith.constant 1.000000e+00 : f32
    %76 = vector.broadcast %cst_28 : f32 to vector<2x32xf32>
    %77 = arith.addf %76, %75 : vector<2x32xf32>
    %78 = arith.divf %76, %77 : vector<2x32xf32>
    %79 = vector.extract_strided_slice %72 {offsets = [0, 32], sizes = [2, 32], strides = [1, 1]} : vector<2x128xf32> to vector<2x32xf32>
    %80 = arith.negf %79 : vector<2x32xf32>
    %81 = math.exp %80 : vector<2x32xf32>
    %cst_29 = arith.constant 1.000000e+00 : f32
    %82 = vector.broadcast %cst_29 : f32 to vector<2x32xf32>
    %83 = arith.addf %82, %81 : vector<2x32xf32>
    %84 = arith.divf %82, %83 : vector<2x32xf32>
    %85 = vector.extract_strided_slice %72 {offsets = [0, 64], sizes = [2, 32], strides = [1, 1]} : vector<2x128xf32> to vector<2x32xf32>
    %86 = math.tanh %85 : vector<2x32xf32>
    %87 = vector.extract_strided_slice %72 {offsets = [0, 96], sizes = [2, 32], strides = [1, 1]} : vector<2x128xf32> to vector<2x32xf32>
    %88 = arith.negf %87 : vector<2x32xf32>
    %89 = math.exp %88 : vector<2x32xf32>
    %cst_30 = arith.constant 1.000000e+00 : f32
    %90 = vector.broadcast %cst_30 : f32 to vector<2x32xf32>
    %91 = arith.addf %90, %89 : vector<2x32xf32>
    %92 = arith.divf %90, %91 : vector<2x32xf32>
    %93 = arith.mulf %84, %63 : vector<2x32xf32>
    %94 = arith.mulf %78, %86 : vector<2x32xf32>
    %95 = arith.addf %93, %94 : vector<2x32xf32>
    %96 = math.tanh %95 : vector<2x32xf32>
    %97 = arith.mulf %92, %96 : vector<2x32xf32>
    %98 = tpu.concatenate %61, %97 in 1 : vector<2x32xf32>, vector<2x32xf32> -> vector<2x64xf32>
    %c0_31 = arith.constant 0 : index
    %c0_32 = arith.constant 0 : index
    %99 = vector.load %arg11[%c0_31, %c0_32] : memref<2x64xf32, #tpu.memory_space<vmem>>, vector<2x64xf32>
    tpu.vector_store %arg11[%c0_31, %c0_32], %98 {strides = array<i32>} : memref<2x64xf32, #tpu.memory_space<vmem>>, vector<2x64xf32>,
    %100 = tpu.concatenate %59, %95 in 1 : vector<2x32xf32>, vector<2x32xf32> -> vector<2x64xf32>
    %c0_33 = arith.constant 0 : index
    %c0_34 = arith.constant 0 : index
    %101 = vector.load %arg12[%c0_33, %c0_34] : memref<2x64xf32, #tpu.memory_space<vmem>>, vector<2x64xf32>
    tpu.vector_store %arg12[%c0_33, %c0_34], %100 {strides = array<i32>} : memref<2x64xf32, #tpu.memory_space<vmem>>, vector<2x64xf32>,
    %102 = arith.truncf %97 : vector<2x32xf32> to vector<2x32xbf16>
    %c0_35 = arith.constant 0 : index
    %c0_36 = arith.constant 0 : index
    %103 = vector.load %arg8[%c0_35, %c0_36] : memref<32x128xbf16, #tpu.memory_space<vmem>>, vector<32x128xbf16>
    %cst_37 = arith.constant dense<0.000000e+00> : vector<2x128xf32>
    %104 = tpu.matmul %102, %103, %cst_37 {dimension_numbers = #tpu.dot_dimension_numbers<[1], [0], [0], [1], [0, 0, 1, 1], [], []>} : vector<2x32xbf16>, vector<32x128xbf16>, vector<2x128xf32> -> vector<2x128xf32>
    %c0_38 = arith.constant 0 : index
    %c0_39 = arith.constant 0 : index
    %105 = vector.load %arg9[%c0_38, %c0_39] : memref<1x128xf32, #tpu.memory_space<vmem>>, vector<1x128xf32>
    %106 = vector.broadcast %105 : vector<1x128xf32> to vector<2x128xf32>
    %107 = arith.addf %104, %106 : vector<2x128xf32>
    %c0_40 = arith.constant 0 : index
    %c0_41 = arith.constant 0 : index
    %c0_42 = arith.constant 0 : index
    %108 = vector.load %arg10[%c0_40, %c0_41, %c0_42] : memref<1x2x128xf32, #tpu.memory_space<vmem>>, vector<1x2x128xf32>
    %109 = vector.shape_cast %108 : vector<1x2x128xf32> to vector<2x128xf32>
    %110 = vector.shape_cast %107 : vector<2x128xf32> to vector<1x2x128xf32>
    tpu.vector_store %arg10[%c0_40, %c0_41, %c0_42], %110 {strides = array<i32>} : memref<1x2x128xf32, #tpu.memory_space<vmem>>, vector<1x2x128xf32>,
    return
  }
  func.func @transform_0(%arg0: i32) -> (i32, i32, i32) {
    %c0_i32 = arith.constant 0 : i32
    %c0_i32_0 = arith.constant 0 : i32
    %c0_i32_1 = arith.constant 0 : i32
    return %arg0, %c0_i32, %c0_i32_0 : i32, i32, i32
  }
  func.func @transform_1(%arg0: i32) -> (i32, i32, i32) {
    %c0_i32 = arith.constant 0 : i32
    %c0_i32_0 = arith.constant 0 : i32
    %c0_i32_1 = arith.constant 0 : i32
    %c0_i32_2 = arith.constant 0 : i32
    return %c0_i32, %c0_i32_0, %c0_i32_1 : i32, i32, i32
  }
  func.func @transform_2(%arg0: i32) -> (i32, i32) {
    %c0_i32 = arith.constant 0 : i32
    %c0_i32_0 = arith.constant 0 : i32
    %c0_i32_1 = arith.constant 0 : i32
    return %c0_i32, %c0_i32_0 : i32, i32
  }
  func.func @transform_3(%arg0: i32) -> (i32, i32) {
    %c0_i32 = arith.constant 0 : i32
    %c0_i32_0 = arith.constant 0 : i32
    %c0_i32_1 = arith.constant 0 : i32
    return %c0_i32, %c0_i32_0 : i32, i32
  }
  func.func @transform_4(%arg0: i32) -> (i32, i32) {
    %c0_i32 = arith.constant 0 : i32
    %c0_i32_0 = arith.constant 0 : i32
    %c0_i32_1 = arith.constant 0 : i32
    return %c0_i32, %c0_i32_0 : i32, i32
  }
  func.func @transform_5(%arg0: i32) -> (i32, i32, i32) {
    %c0_i32 = arith.constant 0 : i32
    %c0_i32_0 = arith.constant 0 : i32
    %c0_i32_1 = arith.constant 0 : i32
    %c0_i32_2 = arith.constant 0 : i32
    return %c0_i32, %c0_i32_0, %c0_i32_1 : i32, i32, i32
  }
  func.func @transform_6(%arg0: i32) -> (i32, i32, i32) {
    %c0_i32 = arith.constant 0 : i32
    %c0_i32_0 = arith.constant 0 : i32
    %c0_i32_1 = arith.constant 0 : i32
    %c0_i32_2 = arith.constant 0 : i32
    return %c0_i32, %c0_i32_0, %c0_i32_1 : i32, i32, i32
  }
  func.func @transform_7(%arg0: i32) -> (i32, i32) {
    %c0_i32 = arith.constant 0 : i32
    %c0_i32_0 = arith.constant 0 : i32
    %c0_i32_1 = arith.constant 0 : i32
    return %c0_i32, %c0_i32_0 : i32, i32
  }
  func.func @transform_8(%arg0: i32) -> (i32, i32) {
    %c0_i32 = arith.constant 0 : i32
    %c0_i32_0 = arith.constant 0 : i32
    %c0_i32_1 = arith.constant 0 : i32
    return %c0_i32, %c0_i32_0 : i32, i32
  }
  func.func @transform_9(%arg0: i32) -> (i32, i32, i32) {
    %c0_i32 = arith.constant 0 : i32
    %c0_i32_0 = arith.constant 0 : i32
    %c0_i32_1 = arith.constant 0 : i32
    return %arg0, %c0_i32, %c0_i32_0 : i32, i32, i32
  }
  func.func @transform_10(%arg0: i32) -> (i32, i32) {
    %c0_i32 = arith.constant 0 : i32
    %c0_i32_0 = arith.constant 0 : i32
    %c0_i32_1 = arith.constant 0 : i32
    return %c0_i32, %c0_i32_0 : i32, i32
  }
  func.func @transform_11(%arg0: i32) -> (i32, i32) {
    %c0_i32 = arith.constant 0 : i32
    %c0_i32_0 = arith.constant 0 : i32
    %c0_i32_1 = arith.constant 0 : i32
    return %c0_i32, %c0_i32_0 : i32, i32
  }
}

</mosaic_0001>

<llo_original>
// kernel: tpu_custom_call.1
$region0: #{tpu_custom_call.1}
  #allocation0 [shape = 'u32[]', space=smem, size = 0x4, offset = 0x4, fixed_abs, tag = 'smem constant byte address 0x4 - core index']
  #allocation1 [shape = 'u32[144,128]{1,0:T(1,128)}', space=vmem, size = 0x12000, scoped, tag = 'internal scratch']
  %s0 = inlined_call_operand.hbm [shape: f32[4,2,8], index: 0, kind: input, shape index: {}]
  %s1 = inlined_call_operand.hbm [shape: f32[2,8,32], index: 1, kind: input, shape index: {}]
  %s2 = inlined_call_operand.vmem [shape: f32[2,64], index: 2, kind: input, shape index: {}]
  %s3 = inlined_call_operand.vmem [shape: f32[2,64], index: 3, kind: input, shape index: {}]
  %s4 = inlined_call_operand.hbm [shape: bf16[72,128], index: 4, kind: input, shape index: {}]
  %s5 = inlined_call_operand.hbm [shape: bf16[1,64,128], index: 5, kind: input, shape index: {}]
  %s6 = inlined_call_operand.vmem [shape: f32[2,1,128], index: 6, kind: input, shape index: {}]
  %s7 = inlined_call_operand.hbm [shape: bf16[32,128], index: 7, kind: input, shape index: {}]
  %s8 = inlined_call_operand.vmem [shape: f32[1,128], index: 8, kind: input, shape index: {}]
  %s9 = inlined_call_operand.hbm [shape: f32[4,2,128], index: 9, kind: output, shape index: {0}]
  %s10 = inlined_call_operand.hbm [shape: f32[2,64], index: 10, kind: output, shape index: {1}]
  %s11 = inlined_call_operand.hbm [shape: f32[2,64], index: 11, kind: output, shape index: {2}]
  %12 = xla_tuple %s9, %s10, %s11
  %s13 = sld [smem:[#allocation0]]
  $region109: #{tpu_custom_call.1} parent=0
    _
  %s15 = ssub.s32 1, %s13
  %s16 = scalar_select 0, %s15, %s13
  $region1: #{tpu_custom_call.1} parent=0
    #allocation2 [shape = 'u8[2048]{0}', space=vmem, size = 0x800, scoped, tag = 'input window, operand 0']
    #allocation3 [shape = 's32[2]{0}', space=sflag, size = 0x8, scoped, tag = 'scoped memory for tpu_custom_call.1']
    #allocation4 [shape = 's32[2]{0}', space=sflag, size = 0x8, scoped, tag = 'scoped memory for tpu_custom_call.1']
    #allocation5 [shape = 'u8[8192]{0}', space=vmem, size = 0x2000, scoped, tag = 'input window, operand 1, single buffered']
    #allocation6 [shape = 's32[1]{0}', space=sflag, size = 0x4, scoped, tag = 'scoped memory for tpu_custom_call.1']
    #allocation7 [shape = 'u8[18432]{0}', space=vmem, size = 0x4800, scoped, tag = 'input window, operand 4, single buffered']
    #allocation8 [shape = 'u8[16384]{0}', space=vmem, size = 0x4000, scoped, tag = 'input window, operand 5, single buffered']
    #allocation9 [shape = 's32[1]{0}', space=sflag, size = 0x4, scoped, tag = 'scoped memory for tpu_custom_call.1']
    #allocation10 [shape = 'u8[8192]{0}', space=vmem, size = 0x2000, scoped, tag = 'input window, operand 7, single buffered']
    #allocation11 [shape = 'u8[2048]{0}', space=vmem, size = 0x800, scoped, tag = 'output window, operand 0']
    #allocation12 [shape = 'u8[1024]{0}', space=vmem, size = 0x400, scoped, tag = 'output window, operand 1, single buffered']
    #allocation13 [shape = 's32[1]{0}', space=sflag, size = 0x4, scoped, tag = 'scoped memory for tpu_custom_call.1']
    #allocation14 [shape = 'u8[1024]{0}', space=vmem, size = 0x400, scoped, tag = 'output window, operand 2, single buffered']
    %17 = vsyncpa [#allocation3], 0
    %s18 = scalar_lea.sflag [#allocation3], 1
    %19 = vsyncpa %s18, 0
    %20 = vsyncpa [#allocation6], 0
    %21 = vsyncpa [#allocation9], 0
    %22 = vsyncpa [#allocation4], 0
    %s23 = scalar_lea.sflag [#allocation4], 1
    %24 = vsyncpa %s23, 0
    %25 = vsyncpa [#allocation13], 0
    loop: start=0, step=1, limit=6
    $region2: #{tpu_custom_call.1} parent=1 // loop_pre_header
      _
    $region3: #{tpu_custom_call.1} parent=1 // loop_header
      %s27 = sphi 0, %s31
      %p28 = scmp.ge.s32.totalorder %s27, 6
      %s37 = sphi 0, %s39
      %s40 = sphi 0, %s37
      %s41 = sphi 0, %s40
      %s57 = sphi 0, %s41
      %s61 = sphi 0, %s61
      %s63 = sphi 0, %s61
      %s64 = sphi 0, %s63
      %s78 = sphi 0, %s64
      %s82 = sphi 0, %s82
      %s84 = sphi 0, %s82
      %s85 = sphi 0, %s84
      %s99 = sphi 0, %s85
      %s103 = sphi 0, %s103
      %s105 = sphi 0, %s103
      %s106 = sphi 0, %s105
      %s120 = sphi 0, %s106
      %s124 = sphi 0, %s124
      %s126 = sphi 0, %s124
      %s127 = sphi 0, %s126
      %s141 = sphi 0, %s127
      %s145 = sphi 0, %s145
      %s147 = sphi 0, %s145
      %s148 = sphi 0, %s147
      %s162 = sphi 0, %s148
      %s166 = sphi 0, %s166
      %s168 = sphi 0, %s166
      %s169 = sphi 0, %s168
      %s183 = sphi 0, %s169
      %s187 = sphi 0, %s187
      %s189 = sphi 0, %s187
      %s190 = sphi 0, %s189
      %s204 = sphi 0, %s190
      %s208 = sphi 0, %s208
      %s210 = sphi 0, %s208
      %s211 = sphi 0, %s210
      %s225 = sphi 0, %s211
      %s231 = sphi 0, %s233
      %s234 = sphi 0, %s231
      %s235 = sphi 0, %s234
      %s251 = sphi 0, %s235
      %s255 = sphi 0, %s255
      %s257 = sphi 0, %s255
      %s258 = sphi 0, %s257
      %s272 = sphi 0, %s258
      %s276 = sphi 0, %s276
      %s278 = sphi 0, %s276
      %s279 = sphi 0, %s278
      %s293 = sphi 0, %s279
    $region4: #{tpu_custom_call.1} parent=1 // loop_header_branch
      %30 = sbr.rel (%p28) target = $region8
    $region5: #{tpu_custom_call.1} parent=1 // loop_body
      %s32 = ssub.s32 %s27, 1
      %s33 = ssub.s32 %s27, 2
      %s34 = sadd.s32 %s27, 1
      %s35 = ssub.s32 %s27, %s34
      %p36 = scmp.eq.s32.totalorder %s35, 0
      %s38 = sadd.s32 %s37, 1
      %s39 = scalar_select %p36, %s37, %s38
      %p42 = pneg %p36
      %p43 = scmp.eq.s32.totalorder %s27, 3
      %p44 = por %p42, %p43
      %p45 = scmp.ne.s32.totalorder %s37, %s40
      %p46 = scmp.eq.s32.totalorder %s27, 0
      %p47 = por %p45, %p46
      %p48 = scmp.ne.s32.totalorder %s37, %s40
      %p49 = scmp.eq.s32.totalorder %s32, 3
      %p50 = por %p48, %p49
      %p51 = scmp.ne.s32.totalorder %s40, %s41
      %p52 = scmp.eq.s32.totalorder %s32, 0
      %p53 = por %p51, %p52
      %p54 = scmp.ne.s32.totalorder %s40, %s41
      %p55 = scmp.eq.s32.totalorder %s33, 3
      %p56 = por %p54, %p55
      %p58 = scmp.ne.s32.totalorder %s41, %s57
      %p59 = scmp.eq.s32.totalorder %s33, 0
      %p60 = por %p58, %p59
      %s62 = sadd.s32 %s61, 1
      %p65 = scmp.eq.s32.totalorder %s27, 3
      %p66 = scmp.ne.s32.totalorder %s61, %s63
      %p67 = scmp.eq.s32.totalorder %s27, 0
      %p68 = por %p66, %p67
      %p69 = scmp.ne.s32.totalorder %s61, %s63
      %p70 = scmp.eq.s32.totalorder %s32, 3
      %p71 = por %p69, %p70
      %p72 = scmp.ne.s32.totalorder %s63, %s64
      %p73 = scmp.eq.s32.totalorder %s32, 0
      %p74 = por %p72, %p73
      %p75 = scmp.ne.s32.totalorder %s63, %s64
      %p76 = scmp.eq.s32.totalorder %s33, 3
      %p77 = por %p75, %p76
      %p79 = scmp.ne.s32.totalorder %s64, %s78
      %p80 = scmp.eq.s32.totalorder %s33, 0
      %p81 = por %p79, %p80
      %s83 = sadd.s32 %s82, 1
      %p86 = scmp.eq.s32.totalorder %s27, 3
      %p87 = scmp.ne.s32.totalorder %s82, %s84
      %p88 = scmp.eq.s32.totalorder %s27, 0
      %p89 = por %p87, %p88
      %p90 = scmp.ne.s32.totalorder %s82, %s84
      %p91 = scmp.eq.s32.totalorder %s32, 3
      %p92 = por %p90, %p91
      %p93 = scmp.ne.s32.totalorder %s84, %s85
      %p94 = scmp.eq.s32.totalorder %s32, 0
      %p95 = por %p93, %p94
      %p96 = scmp.ne.s32.totalorder %s84, %s85
      %p97 = scmp.eq.s32.totalorder %s33, 3
      %p98 = por %p96, %p97
      %p100 = scmp.ne.s32.totalorder %s85, %s99
      %p101 = scmp.eq.s32.totalorder %s33, 0
      %p102 = por %p100, %p101
      %s104 = sadd.s32 %s103, 1
      %p107 = scmp.eq.s32.totalorder %s27, 3
      %p108 = scmp.ne.s32.totalorder %s103, %s105
      %p109 = scmp.eq.s32.totalorder %s27, 0
      %p110 = por %p108, %p109
      %p111 = scmp.ne.s32.totalorder %s103, %s105
      %p112 = scmp.eq.s32.totalorder %s32, 3
      %p113 = por %p111, %p112
      %p114 = scmp.ne.s32.totalorder %s105, %s106
      %p115 = scmp.eq.s32.totalorder %s32, 0
      %p116 = por %p114, %p115
      %p117 = scmp.ne.s32.totalorder %s105, %s106
      %p118 = scmp.eq.s32.totalorder %s33, 3
      %p119 = por %p117, %p118
      %p121 = scmp.ne.s32.totalorder %s106, %s120
      %p122 = scmp.eq.s32.totalorder %s33, 0
      %p123 = por %p121, %p122
      %s125 = sadd.s32 %s124, 1
      %p128 = scmp.eq.s32.totalorder %s27, 3
      %p129 = scmp.ne.s32.totalorder %s124, %s126
      %p130 = scmp.eq.s32.totalorder %s27, 0
      %p131 = por %p129, %p130
      %p132 = scmp.ne.s32.totalorder %s124, %s126
      %p133 = scmp.eq.s32.totalorder %s32, 3
      %p134 = por %p132, %p133
      %p135 = scmp.ne.s32.totalorder %s126, %s127
      %p136 = scmp.eq.s32.totalorder %s32, 0
      %p137 = por %p135, %p136
      %p138 = scmp.ne.s32.totalorder %s126, %s127
      %p139 = scmp.eq.s32.totalorder %s33, 3
      %p140 = por %p138, %p139
      %p142 = scmp.ne.s32.totalorder %s127, %s141
      %p143 = scmp.eq.s32.totalorder %s33, 0
      %p144 = por %p142, %p143
      %s146 = sadd.s32 %s145, 1
      %p149 = scmp.eq.s32.totalorder %s27, 3
      %p150 = scmp.ne.s32.totalorder %s145, %s147
      %p151 = scmp.eq.s32.totalorder %s27, 0
      %p152 = por %p150, %p151
      %p153 = scmp.ne.s32.totalorder %s145, %s147
      %p154 = scmp.eq.s32.totalorder %s32, 3
      %p155 = por %p153, %p154
      %p156 = scmp.ne.s32.totalorder %s147, %s148
      %p157 = scmp.eq.s32.totalorder %s32, 0
      %p158 = por %p156, %p157
      %p159 = scmp.ne.s32.totalorder %s147, %s148
      %p160 = scmp.eq.s32.totalorder %s33, 3
      %p161 = por %p159, %p160
      %p163 = scmp.ne.s32.totalorder %s148, %s162
      %p164 = scmp.eq.s32.totalorder %s33, 0
      %p165 = por %p163, %p164
      %s167 = sadd.s32 %s166, 1
      %p170 = scmp.eq.s32.totalorder %s27, 3
      %p171 = scmp.ne.s32.totalorder %s166, %s168
      %p172 = scmp.eq.s32.totalorder %s27, 0
      %p173 = por %p171, %p172
      %p174 = scmp.ne.s32.totalorder %s166, %s168
      %p175 = scmp.eq.s32.totalorder %s32, 3
      %p176 = por %p174, %p175
      %p177 = scmp.ne.s32.totalorder %s168, %s169
      %p178 = scmp.eq.s32.totalorder %s32, 0
      %p179 = por %p177, %p178
      %p180 = scmp.ne.s32.totalorder %s168, %s169
      %p181 = scmp.eq.s32.totalorder %s33, 3
      %p182 = por %p180, %p181
      %p184 = scmp.ne.s32.totalorder %s169, %s183
      %p185 = scmp.eq.s32.totalorder %s33, 0
      %p186 = por %p184, %p185
      %s188 = sadd.s32 %s187, 1
      %p191 = scmp.eq.s32.totalorder %s27, 3
      %p192 = scmp.ne.s32.totalorder %s187, %s189
      %p193 = scmp.eq.s32.totalorder %s27, 0
      %p194 = por %p192, %p193
      %p195 = scmp.ne.s32.totalorder %s187, %s189
      %p196 = scmp.eq.s32.totalorder %s32, 3
      %p197 = por %p195, %p196
      %p198 = scmp.ne.s32.totalorder %s189, %s190
      %p199 = scmp.eq.s32.totalorder %s32, 0
      %p200 = por %p198, %p199
      %p201 = scmp.ne.s32.totalorder %s189, %s190
      %p202 = scmp.eq.s32.totalorder %s33, 3
      %p203 = por %p201, %p202
      %p205 = scmp.ne.s32.totalorder %s190, %s204
      %p206 = scmp.eq.s32.totalorder %s33, 0
      %p207 = por %p205, %p206
      %s209 = sadd.s32 %s208, 1
      %p212 = scmp.eq.s32.totalorder %s27, 3
      %p213 = scmp.ne.s32.totalorder %s208, %s210
      %p214 = scmp.eq.s32.totalorder %s27, 0
      %p215 = por %p213, %p214
      %p216 = scmp.ne.s32.totalorder %s208, %s210
      %p217 = scmp.eq.s32.totalorder %s32, 3
      %p218 = por %p216, %p217
      %p219 = scmp.ne.s32.totalorder %s210, %s211
      %p220 = scmp.eq.s32.totalorder %s32, 0
      %p221 = por %p219, %p220
      %p222 = scmp.ne.s32.totalorder %s210, %s211
      %p223 = scmp.eq.s32.totalorder %s33, 3
      %p224 = por %p222, %p223
      %p226 = scmp.ne.s32.totalorder %s211, %s225
      %p227 = scmp.eq.s32.totalorder %s33, 0
      %p228 = por %p226, %p227
      %s229 = ssub.s32 %s27, %s34
      %p230 = scmp.eq.s32.totalorder %s229, 0
      %s232 = sadd.s32 %s231, 1
      %s233 = scalar_select %p230, %s231, %s232
      %p236 = pneg %p230
      %p237 = scmp.eq.s32.totalorder %s27, 3
      %p238 = por %p236, %p237
      %p239 = scmp.ne.s32.totalorder %s231, %s234
      %p240 = scmp.eq.s32.totalorder %s27, 0
      %p241 = por %p239, %p240
      %p242 = scmp.ne.s32.totalorder %s231, %s234
      %p243 = scmp.eq.s32.totalorder %s32, 3
      %p244 = por %p242, %p243
      %p245 = scmp.ne.s32.totalorder %s234, %s235
      %p246 = scmp.eq.s32.totalorder %s32, 0
      %p247 = por %p245, %p246
      %p248 = scmp.ne.s32.totalorder %s234, %s235
      %p249 = scmp.eq.s32.totalorder %s33, 3
      %p250 = por %p248, %p249
      %p252 = scmp.ne.s32.totalorder %s235, %s251
      %p253 = scmp.eq.s32.totalorder %s33, 0
      %p254 = por %p252, %p253
      %s256 = sadd.s32 %s255, 1
      %p259 = scmp.eq.s32.totalorder %s27, 3
      %p260 = scmp.ne.s32.totalorder %s255, %s257
      %p261 = scmp.eq.s32.totalorder %s27, 0
      %p262 = por %p260, %p261
      %p263 = scmp.ne.s32.totalorder %s255, %s257
      %p264 = scmp.eq.s32.totalorder %s32, 3
      %p265 = por %p263, %p264
      %p266 = scmp.ne.s32.totalorder %s257, %s258
      %p267 = scmp.eq.s32.totalorder %s32, 0
      %p268 = por %p266, %p267
      %p269 = scmp.ne.s32.totalorder %s257, %s258
      %p270 = scmp.eq.s32.totalorder %s33, 3
      %p271 = por %p269, %p270
      %p273 = scmp.ne.s32.totalorder %s258, %s272
      %p274 = scmp.eq.s32.totalorder %s33, 0
      %p275 = por %p273, %p274
      %s277 = sadd.s32 %s276, 1
      %p280 = scmp.eq.s32.totalorder %s27, 3
      %p281 = scmp.ne.s32.totalorder %s276, %s278
      %p282 = scmp.eq.s32.totalorder %s27, 0
      %p283 = por %p281, %p282
      %p284 = scmp.ne.s32.totalorder %s276, %s278
      %p285 = scmp.eq.s32.totalorder %s32, 3
      %p286 = por %p284, %p285
      %p287 = scmp.ne.s32.totalorder %s278, %s279
      %p288 = scmp.eq.s32.totalorder %s32, 0
      %p289 = por %p287, %p288
      %p290 = scmp.ne.s32.totalorder %s278, %s279
      %p291 = scmp.eq.s32.totalorder %s33, 3
      %p292 = por %p290, %p291
      %p294 = scmp.ne.s32.totalorder %s279, %s293
      %p295 = scmp.eq.s32.totalorder %s33, 0
      %p296 = por %p294, %p295
      %p297 = scmp.le.s32.totalorder 1, %s27
      %p298 = scmp.lt.s32.totalorder %s27, 5
      %p299 = pnand %p297, %p298
      %p300 = pneg %p299
      // Predicated region
      $region9: #{tpu_custom_call.1} parent=5 // pred_check
        _
      $region10: #{tpu_custom_call.1} parent=5 // pred_check_branch
        %302 = sbr.rel (%p299) target = $region12
      $region11: #{tpu_custom_call.1} parent=5 // pred_region
        %s303 = ssub.s32 %s27, 1
        // Predicated region
        $region13: #{tpu_custom_call.1} parent=11 // pred_check
          %p304 = pneg %p74
        $region14: #{tpu_custom_call.1} parent=11 // pred_check_branch
          %306 = sbr.rel (%p304) target = $region16
        $region15: #{tpu_custom_call.1} parent=11 // pred_region
          %s308 = ssub.s32 256, 256
          %309 = vsyncadd [#allocation6], %s308
          %s310 = sshll.u32 [#allocation5], 4
          %s311 = int_to_ptr.vmem [resolvable:$true] %s310
          %316 = dma.hbm_to_vmem [thread:$0]  %s1, 256, %s311, [#allocation6], 128, 128, 8
        $region16: #{tpu_custom_call.1} parent=11 // pred_fallthru
          _
        // Predicated region
        $region17: #{tpu_custom_call.1} parent=11 // pred_check
          %p317 = pneg %p95
        $region18: #{tpu_custom_call.1} parent=11 // pred_check_branch
          %319 = sbr.rel (%p317) target = $region20
        $region19: #{tpu_custom_call.1} parent=11 // pred_region
          _
        $region20: #{tpu_custom_call.1} parent=11 // pred_fallthru
          _
        // Predicated region
        $region21: #{tpu_custom_call.1} parent=11 // pred_check
          %p320 = pneg %p116
        $region22: #{tpu_custom_call.1} parent=11 // pred_check_branch
          %322 = sbr.rel (%p320) target = $region24
        $region23: #{tpu_custom_call.1} parent=11 // pred_region
          _
        $region24: #{tpu_custom_call.1} parent=11 // pred_fallthru
          _
        // Predicated region
        $region25: #{tpu_custom_call.1} parent=11 // pred_check
          %p323 = pneg %p137
        $region26: #{tpu_custom_call.1} parent=11 // pred_check_branch
          %325 = sbr.rel (%p323) target = $region28
        $region27: #{tpu_custom_call.1} parent=11 // pred_region
          %s327 = ssub.s32 576, 576
          %328 = vsyncadd [#allocation6], %s327
          %s329 = sshll.u32 [#allocation7], 4
          %s330 = int_to_ptr.vmem [resolvable:$true] %s329
          %335 = dma.hbm_to_vmem [thread:$0]  %s4, 576, %s330, [#allocation6], 64, 64, 4
        $region28: #{tpu_custom_call.1} parent=11 // pred_fallthru
          _
        // Predicated region
        $region29: #{tpu_custom_call.1} parent=11 // pred_check
          %p336 = pneg %p158
        $region30: #{tpu_custom_call.1} parent=11 // pred_check_branch
          %338 = sbr.rel (%p336) target = $region32
        $region31: #{tpu_custom_call.1} parent=11 // pred_region
          %s340 = ssub.s32 512, 512
          %341 = vsyncadd [#allocation9], %s340
          %s342 = sshll.u32 [#allocation8], 4
          %s343 = int_to_ptr.vmem [resolvable:$true] %s342
          %348 = dma.hbm_to_vmem [thread:$0]  %s5, 512, %s343, [#allocation9], 64, 64, 4
        $region32: #{tpu_custom_call.1} parent=11 // pred_fallthru
          _
        // Predicated region
        $region33: #{tpu_custom_call.1} parent=11 // pred_check
          %p349 = pneg %p179
        $region34: #{tpu_custom_call.1} parent=11 // pred_check_branch
          %351 = sbr.rel (%p349) target = $region36
        $region35: #{tpu_custom_call.1} parent=11 // pred_region
          _
        $region36: #{tpu_custom_call.1} parent=11 // pred_fallthru
          _
        // Predicated region
        $region37: #{tpu_custom_call.1} parent=11 // pred_check
          %p352 = pneg %p200
        $region38: #{tpu_custom_call.1} parent=11 // pred_check_branch
          %354 = sbr.rel (%p352) target = $region40
        $region39: #{tpu_custom_call.1} parent=11 // pred_region
          %s356 = ssub.s32 256, 256
          %357 = vsyncadd [#allocation9], %s356
          %s358 = sshll.u32 [#allocation10], 4
          %s359 = int_to_ptr.vmem [resolvable:$true] %s358
          %364 = dma.hbm_to_vmem [thread:$0]  %s7, 256, %s359, [#allocation9], 64, 64, 4
        $region40: #{tpu_custom_call.1} parent=11 // pred_fallthru
          _
        // Predicated region
        $region41: #{tpu_custom_call.1} parent=11 // pred_check
          %p365 = pneg %p221
        $region42: #{tpu_custom_call.1} parent=11 // pred_check_branch
          %367 = sbr.rel (%p365) target = $region44
        $region43: #{tpu_custom_call.1} parent=11 // pred_region
          _
        $region44: #{tpu_custom_call.1} parent=11 // pred_fallthru
          _
      $region12: #{tpu_custom_call.1} parent=5 // pred_fallthru
        _
      %p368 = scmp.lt.s32.totalorder %s27, 4
      // Predicated region
      $region45: #{tpu_custom_call.1} parent=5 // pred_check
        %p369 = pneg %p368
      $region46: #{tpu_custom_call.1} parent=5 // pred_check_branch
        %371 = sbr.rel (%p369) target = $region48
      $region47: #{tpu_custom_call.1} parent=5 // pred_region
        // Predicated region
        $region49: #{tpu_custom_call.1} parent=47 // pred_check
          %p372 = pneg %p47
        $region50: #{tpu_custom_call.1} parent=47 // pred_check_branch
          %374 = sbr.rel (%p372) target = $region52
        $region51: #{tpu_custom_call.1} parent=47 // pred_region
          %s375 = sand.u32 %s37, 1
          %s376 = scalar_lea.sflag [#allocation3], %s375
          %s377 = sand.u32 %s37, 1
          %s378 = smul.addr %s377, 2
          %s379 = scalar_lea.vmem [#allocation2], %s378
          %s381 = ssub.s32 32, 32
          %382 = vsyncadd %s376, %s381
          %s383 = smul.addr %s27, 32
          %s384 = scalar_lea.hbm %s0, %s383
          %s386 = sshll.u32 %s379, 4
          %s387 = int_to_ptr.vmem [resolvable:$true] %s386
          %389 = dma.hbm_to_vmem [thread:$0]  %s384, 32, %s387, %s376
        $region52: #{tpu_custom_call.1} parent=47 // pred_fallthru
          _
      $region48: #{tpu_custom_call.1} parent=5 // pred_fallthru
        _
      %p390 = scmp.le.s32.totalorder 1, %s27
      %p391 = scmp.lt.s32.totalorder %s27, 5
      %p392 = pnand %p390, %p391
      %p393 = pneg %p392
      // Predicated region
      $region53: #{tpu_custom_call.1} parent=5 // pred_check
        _
      $region54: #{tpu_custom_call.1} parent=5 // pred_check_branch
        %395 = sbr.rel (%p392) target = $region56
      $region55: #{tpu_custom_call.1} parent=5 // pred_region
        %s396 = ssub.s32 %s27, 1
        %s397 = sand.u32 %s40, 1
        %s398 = scalar_lea.sflag [#allocation3], %s397
        %s399 = sand.u32 %s40, 1
        %s400 = smul.addr %s399, 2
        %s401 = scalar_lea.vmem [#allocation2], %s400
        // Predicated region
        $region57: #{tpu_custom_call.1} parent=55 // pred_check
          %p402 = pneg %p53
        $region58: #{tpu_custom_call.1} parent=55 // pred_check_branch
          %404 = sbr.rel (%p402) target = $region60
        $region59: #{tpu_custom_call.1} parent=55 // pred_region
          %405 = dma.done %s398, 32
        $region60: #{tpu_custom_call.1} parent=55 // pred_fallthru
          _
        // Predicated region
        $region61: #{tpu_custom_call.1} parent=55 // pred_check
          %p406 = pneg %p74
        $region62: #{tpu_custom_call.1} parent=55 // pred_check_branch
          %408 = sbr.rel (%p406) target = $region64
        $region63: #{tpu_custom_call.1} parent=55 // pred_region
          %409 = dma.done [#allocation6], 256
        $region64: #{tpu_custom_call.1} parent=55 // pred_fallthru
          _
        // Predicated region
        $region65: #{tpu_custom_call.1} parent=55 // pred_check
          %p410 = pneg %p137
        $region66: #{tpu_custom_call.1} parent=55 // pred_check_branch
          %412 = sbr.rel (%p410) target = $region68
        $region67: #{tpu_custom_call.1} parent=55 // pred_region
          %413 = dma.done [#allocation6], 576
        $region68: #{tpu_custom_call.1} parent=55 // pred_fallthru
          _
        // Predicated region
        $region69: #{tpu_custom_call.1} parent=55 // pred_check
          %p414 = pneg %p158
        $region70: #{tpu_custom_call.1} parent=55 // pred_check_branch
          %416 = sbr.rel (%p414) target = $region72
        $region71: #{tpu_custom_call.1} parent=55 // pred_region
          %417 = dma.done [#allocation9], 512
        $region72: #{tpu_custom_call.1} parent=55 // pred_fallthru
          _
        // Predicated region
        $region73: #{tpu_custom_call.1} parent=55 // pred_check
          %p418 = pneg %p200
        $region74: #{tpu_custom_call.1} parent=55 // pred_check_branch
          %420 = sbr.rel (%p418) target = $region76
        $region75: #{tpu_custom_call.1} parent=55 // pred_region
          %421 = dma.done [#allocation9], 256
        $region76: #{tpu_custom_call.1} parent=55 // pred_fallthru
          _
        %s422 = sand.u32 %s40, 1
        %s423 = scalar_lea.sflag [#allocation3], %s422
        %s424 = sand.u32 %s40, 1
        %s425 = smul.addr %s424, 2
        %s426 = scalar_lea.vmem [#allocation2], %s425
        %p427 = pneg %p53
        %p428 = pneg %p50
        %p429 = pneg %p74
        %p430 = pneg %p71
        %p431 = pneg %p95
        %p432 = pneg %p92
        %p433 = pneg %p116
        %p434 = pneg %p113
        %p435 = pneg %p137
        %p436 = pneg %p134
        %p437 = pneg %p158
        %p438 = pneg %p155
        %p439 = pneg %p179
        %p440 = pneg %p176
        %p441 = pneg %p200
        %p442 = pneg %p197
        %p443 = pneg %p221
        %p444 = pneg %p218
        %p445 = pneg %p247
        %p446 = pneg %p244
        %s447 = sand.u32 %s234, 1
        %s448 = scalar_lea.sflag [#allocation4], %s447
        %s449 = sand.u32 %s234, 1
        %s450 = smul.addr %s449, 2
        %s451 = scalar_lea.vmem [#allocation11], %s450
        %p452 = pneg %p268
        %p453 = pneg %p265
        %p454 = pneg %p289
        %p455 = pneg %p286
        %p457 = scmp.eq.s32.totalorder %s32, 0
        // Predicated region
        $region77: #{tpu_custom_call.1} parent=55 // pred_check
          %p458 = pneg %p457
        $region78: #{tpu_custom_call.1} parent=55 // pred_check_branch
          %460 = sbr.rel (%p458) target = $region80
        $region79: #{tpu_custom_call.1} parent=55 // pred_region
          %v461 = vld [vmem:[%s2] sm:$0x3]
          %vm462 = vcmask 517120
          %463 = vst.msk [vmem:[#allocation12] sm:$0x3] %vm462, %v461
          %v464 = vld [vmem:[%s3] sm:$0x3]
          %465 = vst.msk [vmem:[#allocation14] sm:$0x3] %vm462, %v464
        $region80: #{tpu_custom_call.1} parent=55 // pred_fallthru
          _
        %v466 = vld [vmem:[%s401] sm:$0x3]
        %v467 = vld [vmem:[#allocation5] sm:$0xff]
        %v468 = vld [vmem:[#allocation5 + $0x8] sm:$0xff]
        %v469 = vld [vmem:[#allocation12] sm:$0x3]
        %v470 = vld [vmem:[#allocation14] sm:$0x3]
        %v473 = vunpack.c.l.s4 1966171168
        %v474 = vunpack.c.0.s8 %v473
        %v475 = vlaneseq
        %v476 = vshrl.u32 %v475, 7
        %v477 = vsub.s32 %v474, %v476
        %v478 = vrot.slane %v469, %v477
        %v479 = vcombine.high %v478, %v478
        %v481 = vunpack.c.l.s4 1966171168
        %v482 = vunpack.c.0.s8 %v481
        %v483 = vlaneseq
        %v484 = vshrl.u32 %v483, 7
        %v485 = vsub.s32 %v482, %v484
        %v486 = vrot.slane %v478, %v485
        %v488 = vunpack.c.l.s4 1966171168
        %v489 = vunpack.c.0.s8 %v488
        %v490 = vlaneseq
        %v491 = vshrl.u32 %v490, 7
        %v492 = vsub.s32 %v489, %v491
        %v493 = vrot.slane %v479, %v492
        %v494 = vlaneseq
        %v495 = vshrl.u32 %v494, 7
        %v496 = vsub.s32 0, %v495
        %v497 = vrot.slane %v486, %v496
        %v498 = vlaneseq
        %v499 = vshrl.u32 %v498, 7
        %v500 = vsub.s32 0, %v499
        %v501 = vrot.slane %v493, %v500
        %502 = vrot.lane.b32.xlu0 %v497, 96
        %v503 = vpop.permute.xlu0 %502
        %504 = vrot.lane.b32.xlu0 %v501, 96
        %v505 = vpop.permute.xlu0 %504
        %v508 = vmul.f32 %v467, %v503
        %v509 = vmul.f32 %v468, %v505
        %vm510 = vcmask 261120
        %v511 = vsel %vm510, %v508, 0.0
        %512 = vadd.xlane.f32.xlu0 %v511
        %v513 = vpop.xlane.xlu0 %512
        %v514 = vsel %vm510, %v509, 0.0
        %515 = vadd.xlane.f32.xlu0 %v514
        %v516 = vpop.xlane.xlu0 %515
        %v519 = vlaneseq
        %v520 = vand.u32 %v519, 127
        %v521 = vlaneseq
        %v522 = vshrl.u32 %v521, 7
        %v523 = vsub.s32 %v520, %v522
        %v524 = vrot.slane %v513, %v523
        %v525 = vlaneseq
        %v526 = vshrl.u32 %v525, 7
        %v527 = vsub.s32 %v520, %v526
        %v528 = vrot.slane %v516, %v527
        %vm529 = vcmask 1041409
        %v530 = vsel %vm529, %v528, %v524
        %vm532 = vcmask 58368
        %v533 = vsel %vm532, %v530, -inf
        %534 = vmax.xlane.f32.xlu0 %v533
        %v535 = vpop.xlane.xlu0 %534
        %v537 = vlaneseq
        %v538 = vshrl.u32 %v537, 7
        %v539 = vsub.s32 0, %v538
        %v540 = vrot.slane %v535, %v539
        %v541 = vlaneseq
        %v542 = vshrl.u32 %v541, 7
        %v543 = vsub.s32 1, %v542
        %v544 = vrot.slane %v535, %v543
        %v547 = vsub.f32 %v513, %v540
        %v548 = vsub.f32 %v516, %v544
        %v549 = vmul.f32 %v547, 1.442695
        %v550 = vpow.pop %v549
        %v551 = vmul.f32 %v548, 1.442695
        %v552 = vpow.pop %v551
        %555 = vset.pattern.permute.xlu0 0
        %556 = vperm.xlu0 %555, %v550
        %v557 = vpop.permute.xlu0 %556
        %558 = vset.pattern.permute.xlu0 0
        %559 = vperm.xlu0 %558, %v552
        %v560 = vpop.permute.xlu0 %559
        %v561 = vlaneseq
        %v562 = vshrl.u32 %v561, 7
        %v563 = vsub.s32 %v520, %v562
        %v564 = vrot.slane %v557, %v563
        %v565 = vlaneseq
        %v566 = vshrl.u32 %v565, 7
        %v567 = vsub.s32 %v520, %v566
        %v568 = vrot.slane %v560, %v567
        %v569 = vsel %vm529, %v568, %v564
        %v571 = vsel %vm532, %v569, 0.0
        %572 = vadd.xlane.f32.xlu0 %v571
        %v573 = vpop.xlane.xlu0 %572
        %v574 = vrcp.pop %v573
        %v576 = vlaneseq
        %v577 = vshrl.u32 %v576, 7
        %v578 = vsub.s32 0, %v577
        %v579 = vrot.slane %v574, %v578
        %v580 = vlaneseq
        %v581 = vshrl.u32 %v580, 7
        %v582 = vsub.s32 1, %v581
        %v583 = vrot.slane %v574, %v582
        %v586 = vmul.f32 %v550, %v579
        %v587 = vmul.f32 %v552, %v583
        %589 = vset.pattern.permute.xlu0 0
        %590 = vperm.xlu0 %589, %v586
        %v591 = vpop.permute.xlu0 %590
        %594 = vset.pattern.permute.xlu0 0
        %595 = vperm.xlu0 %594, %v587
        %v596 = vpop.permute.xlu0 %595
        %v598 = vmul.f32 %v591, %v467
        %v599 = vmul.f32 %v596, %v468
        %v600 = vsel %vm510, %v598, 0.0
        %v601 = vrot.slane %v600, 4
        %v602 = vadd.f32 %v600, %v601
        %v603 = vrot.slane %v602, 2
        %v604 = vadd.f32 %v602, %v603
        %v605 = vrot.slane %v604, 1
        %v606 = vadd.f32 %v604, %v605
        %v607 = vsel %vm510, %v599, 0.0
        %v608 = vrot.slane %v607, 4
        %v609 = vadd.f32 %v607, %v608
        %v610 = vrot.slane %v609, 2
        %v611 = vadd.f32 %v609, %v610
        %v612 = vrot.slane %v611, 1
        %v613 = vadd.f32 %v611, %v612
        %v616 = vsel %vm529, %v613, %v606
        %617 = vrot.lane.b32.xlu0 %v616, 8
        %v618 = vpop.permute.xlu0 %617
        %620 = vrot.lane.b32.xlu0 %v469, 40
        %v621 = vpop.permute.xlu0 %620
        %vm623 = vcmask 64512
        %v624 = vsel %vm623, %v466, %v618
        %vm625 = vcmask 326656
        %v626 = vsel %vm625, %v624, %v621
        %v627 = vld [vmem:[#allocation7] sm:$0xf]
        %v628 = vld [vmem:[#allocation7 + $0x4] sm:$0xf]
        %v629 = vld [vmem:[#allocation7 + $0x8] sm:$0xf]
        %v630 = vld [vmem:[#allocation7 + $0xc] sm:$0xf]
        %v631 = vld [vmem:[#allocation7 + $0x10] sm:$0xf]
        %v632 = vld [vmem:[#allocation7 + $0x14] sm:$0xf]
        %v633 = vld [vmem:[#allocation7 + $0x18] sm:$0xf]
        %v634 = vld [vmem:[#allocation7 + $0x1c] sm:$0xf]
        %v635 = vld [vmem:[#allocation7 + $0x20] sm:$0xf]
        %v636 = vpack.c.bf16 %v626, %v626
        %v637 = vld [vmem:[%s6] sm:$0x1]
        %v639 = vlaneseq
        %v640 = vshrl.u32 %v639, 7
        %v641 = vsub.s32 0, %v640
        %v642 = vrot.slane %v637, %v641
        %v653 = vunpack.c.l.b16 %v627
        %v654 = vunpack.c.l.b16 %v628
        %v655 = vunpack.c.l.b16 %v629
        %v656 = vunpack.c.l.b16 %v630
        %v657 = vunpack.c.l.b16 %v631
        %v658 = vunpack.c.l.b16 %v632
        %v659 = vunpack.c.l.b16 %v633
        %v660 = vunpack.c.l.b16 %v634
        %v661 = vunpack.c.l.b16 %v635
        %v662 = vpack.c.b16 %v654, %v653
        %v663 = vpack.c.b16 %v656, %v655
        %v664 = vpack.c.b16 %v658, %v657
        %v665 = vpack.c.b16 %v660, %v659
        %v666 = vpack.c.b16 %v661, %v661
        %vm671 = vcmask 588800
        %v673 = vsel %vm671, %v636, 0
        %vm675 = vcmask 1043456
        %v677 = vsel %vm675, %v666, 0
        %679 = vmatprep.subr.bf16.mxu0 0
        %680 = vmatpush1.bf16.msra.mxu0 0
        %681 = vmatprep.subr.bf16.mxu0 0
        %682 = vmatpush1.bf16.msra.mxu0 0
        %683 = vmatprep.subr.bf16.mxu0 0
        %684 = vmatpush1.bf16.msra.mxu0 0
        %685 = vmatprep.subr.bf16.mxu0 0
        %686 = vmatpush1.bf16.msra.mxu0 %v677
        %687 = vmatprep.subr.bf16.mxu0 0
        %688 = vmatpush1.bf16.msra.mxu0 %v665
        %689 = vmatprep.subr.bf16.mxu0 0
        %690 = vmatpush1.bf16.msra.mxu0 %v664
        %691 = vmatprep.subr.bf16.mxu0 0
        %692 = vmatpush1.bf16.msra.mxu0 %v663
        %693 = vmatprep.subr.bf16.mxu0 0
        %694 = vmatpush1.bf16.msra.mxu0 %v662
        %695 = vmatprep.subr.bf16.mxu0 0
        %696 = vmatpush2.bf16.msra.mxu0 0
        %697 = vmatprep.subr.bf16.mxu0 0
        %698 = vmatpush2.bf16.msra.mxu0 0
        %699 = vmatprep.subr.bf16.mxu0 0
        %700 = vmatpush2.bf16.msra.mxu0 0
        %701 = vmatprep.subr.bf16.mxu0 0
        %702 = vmatpush2.bf16.msra.mxu0 0
        %703 = vmatprep.subr.bf16.mxu0 0
        %704 = vmatpush2.bf16.msra.mxu0 0
        %705 = vmatprep.subr.bf16.mxu0 0
        %706 = vmatpush2.bf16.msra.mxu0 0
        %707 = vmatprep.subr.bf16.mxu0 0
        %708 = vmatpush2.bf16.msra.mxu0 0
        %709 = vmatprep.subr.bf16.mxu0 0
        %710 = vmatpush2.bf16.msra.mxu0 0
        %711 = vmatprep.mubr.bf16.mxu0 0
        %712 = vmatmul.mubr.bf16.gmra.mxu0 %v673
        %v713 = vpop.f32.mrf.mxu0
        %v714 = vadd.f32 %v642, %v713
        %v715 = vpop.f32.mrf.mxu0
        %v716 = vpop.f32.mrf.mxu0
        %v717 = vpop.f32.mrf.mxu0
        %718 = vdwg.mxu0
        %v719 = vxor.u32 %v714, 2147483648
        %v720 = vmul.f32 %v719, 1.442695
        %v721 = vpow.pop %v720
        %v722 = vadd.f32 %v721, 1.0
        %v723 = vrcp.pop %v722
        %v724 = vmul.f32 1.0, %v723
        %v725 = vtanh.pop %v714
        %727 = vrot.lane.b32.xlu0 %v470, 32
        %v728 = vpop.permute.xlu0 %727
        %v730 = vmul.f32 %v724, %v728
        %732 = vrot.lane.b32.xlu0 %v725, 64
        %v733 = vpop.permute.xlu0 %732
        %v735 = vmul.f32 %v724, %v733
        %737 = vrot.lane.b32.xlu0 %v735, 32
        %v738 = vpop.permute.xlu0 %737
        %v740 = vadd.f32 %v730, %v738
        %v741 = vtanh.pop %v740
        %743 = vrot.lane.b32.xlu0 %v741, 64
        %v744 = vpop.permute.xlu0 %743
        %v746 = vmul.f32 %v724, %v744
        %748 = vrot.lane.b32.xlu0 %v746, 32
        %v749 = vpop.permute.xlu0 %748
        %v751 = vsel %vm510, %v749, %v469
        %v752 = vld [vmem:[#allocation8] sm:$0xf]
        %v753 = vld [vmem:[#allocation8 + $0x4] sm:$0xf]
        %v754 = vld [vmem:[#allocation8 + $0x8] sm:$0xf]
        %v755 = vld [vmem:[#allocation8 + $0xc] sm:$0xf]
        %v756 = vld [vmem:[#allocation8 + $0x10] sm:$0xf]
        %v757 = vld [vmem:[#allocation8 + $0x14] sm:$0xf]
        %v758 = vld [vmem:[#allocation8 + $0x18] sm:$0xf]
        %v759 = vld [vmem:[#allocation8 + $0x1c] sm:$0xf]
        %v760 = vpack.c.bf16 %v751, %v751
        %s761 = scalar_lea.vmem %s6, 1
        %v762 = vld [vmem:[%s761] sm:$0x1]
        %v764 = vlaneseq
        %v765 = vshrl.u32 %v764, 7
        %v766 = vsub.s32 0, %v765
        %v767 = vrot.slane %v762, %v766
        %v777 = vunpack.c.l.b16 %v752
        %v778 = vunpack.c.l.b16 %v753
        %v779 = vunpack.c.l.b16 %v754
        %v780 = vunpack.c.l.b16 %v755
        %v781 = vunpack.c.l.b16 %v756
        %v782 = vunpack.c.l.b16 %v757
        %v783 = vunpack.c.l.b16 %v758
        %v784 = vunpack.c.l.b16 %v759
        %v785 = vpack.c.b16 %v778, %v777
        %v786 = vpack.c.b16 %v780, %v779
        %v787 = vpack.c.b16 %v782, %v781
        %v788 = vpack.c.b16 %v784, %v783
        %vm793 = vcmask 523264
        %v795 = vsel %vm793, %v760, 0
        %797 = vmatprep.subr.bf16.mxu0 0
        %798 = vmatpush1.bf16.msra.mxu0 0
        %799 = vmatprep.subr.bf16.mxu0 0
        %800 = vmatpush1.bf16.msra.mxu0 0
        %801 = vmatprep.subr.bf16.mxu0 0
        %802 = vmatpush1.bf16.msra.mxu0 0
        %803 = vmatprep.subr.bf16.mxu0 0
        %804 = vmatpush1.bf16.msra.mxu0 0
        %805 = vmatprep.subr.bf16.mxu0 0
        %806 = vmatpush1.bf16.msra.mxu0 %v788
        %807 = vmatprep.subr.bf16.mxu0 0
        %808 = vmatpush1.bf16.msra.mxu0 %v787
        %809 = vmatprep.subr.bf16.mxu0 0
        %810 = vmatpush1.bf16.msra.mxu0 %v786
        %811 = vmatprep.subr.bf16.mxu0 0
        %812 = vmatpush1.bf16.msra.mxu0 %v785
        %813 = vmatprep.subr.bf16.mxu0 0
        %814 = vmatpush2.bf16.msra.mxu0 0
        %815 = vmatprep.subr.bf16.mxu0 0
        %816 = vmatpush2.bf16.msra.mxu0 0
        %817 = vmatprep.subr.bf16.mxu0 0
        %818 = vmatpush2.bf16.msra.mxu0 0
        %819 = vmatprep.subr.bf16.mxu0 0
        %820 = vmatpush2.bf16.msra.mxu0 0
        %821 = vmatprep.subr.bf16.mxu0 0
        %822 = vmatpush2.bf16.msra.mxu0 0
        %823 = vmatprep.subr.bf16.mxu0 0
        %824 = vmatpush2.bf16.msra.mxu0 0
        %825 = vmatprep.subr.bf16.mxu0 0
        %826 = vmatpush2.bf16.msra.mxu0 0
        %827 = vmatprep.subr.bf16.mxu0 0
        %828 = vmatpush2.bf16.msra.mxu0 0
        %829 = vmatprep.mubr.bf16.mxu0 0
        %830 = vmatmul.mubr.bf16.gmra.mxu0 %v795
        %v831 = vpop.f32.mrf.mxu0
        %v832 = vadd.f32 %v767, %v831
        %v833 = vpop.f32.mrf.mxu0
        %v834 = vpop.f32.mrf.mxu0
        %v835 = vpop.f32.mrf.mxu0
        %836 = vdwg.mxu0
        %v837 = vxor.u32 %v832, 2147483648
        %v838 = vmul.f32 %v837, 1.442695
        %v839 = vpow.pop %v838
        %v840 = vadd.f32 %v839, 1.0
        %v841 = vrcp.pop %v840
        %v842 = vmul.f32 1.0, %v841
        %v843 = vtanh.pop %v832
        %v844 = vmul.f32 %v842, %v470
        %846 = vrot.lane.b32.xlu0 %v843, 64
        %v847 = vpop.permute.xlu0 %846
        %v849 = vmul.f32 %v842, %v847
        %851 = vrot.lane.b32.xlu0 %v849, 32
        %v852 = vpop.permute.xlu0 %851
        %v854 = vadd.f32 %v844, %v852
        %v855 = vtanh.pop %v854
        %857 = vrot.lane.b32.xlu0 %v855, 64
        %v858 = vpop.permute.xlu0 %857
        %v860 = vmul.f32 %v842, %v858
        %862 = vrot.lane.b32.xlu0 %v860, 64
        %v863 = vpop.permute.xlu0 %862
        %v865 = vsel %vm510, %v749, %v863
        %vm866 = vcmask 517120
        %867 = vst.msk [vmem:[#allocation12] sm:$0x3] %vm866, %v865
        %869 = vrot.lane.b32.xlu0 %v740, 96
        %v870 = vpop.permute.xlu0 %869
        %v872 = vsel %vm510, %v870, %v854
        %873 = vst.msk [vmem:[#allocation14] sm:$0x3] %vm866, %v872
        %v874 = vpack.c.bf16 %v860, %v860
        %v875 = vld [vmem:[#allocation10] sm:$0xf]
        %v876 = vld [vmem:[#allocation10 + $0x4] sm:$0xf]
        %v877 = vld [vmem:[#allocation10 + $0x8] sm:$0xf]
        %v878 = vld [vmem:[#allocation10 + $0xc] sm:$0xf]
        %v879 = vld [vmem:[%s8] sm:$0x1]
        %v881 = vlaneseq
        %v882 = vshrl.u32 %v881, 7
        %v883 = vsub.s32 0, %v882
        %v884 = vrot.slane %v879, %v883
        %887 = vrot.lane.b32.xlu0 %v874, 32
        %v888 = vpop.permute.xlu0 %887
        %v893 = vunpack.c.l.b16 %v875
        %v894 = vunpack.c.l.b16 %v876
        %v895 = vunpack.c.l.b16 %v877
        %v896 = vunpack.c.l.b16 %v878
        %v897 = vpack.c.b16 %v894, %v893
        %v898 = vpack.c.b16 %v896, %v895
        %v902 = vsel %vm510, %v888, 0
        %904 = vmatprep.subr.bf16.mxu0 0
        %905 = vmatpush1.bf16.msra.mxu0 0
        %906 = vmatprep.subr.bf16.mxu0 0
        %907 = vmatpush1.bf16.msra.mxu0 0
        %908 = vmatprep.subr.bf16.mxu0 0
        %909 = vmatpush1.bf16.msra.mxu0 0
        %910 = vmatprep.subr.bf16.mxu0 0
        %911 = vmatpush1.bf16.msra.mxu0 0
        %912 = vmatprep.subr.bf16.mxu0 0
        %913 = vmatpush1.bf16.msra.mxu0 0
        %914 = vmatprep.subr.bf16.mxu0 0
        %915 = vmatpush1.bf16.msra.mxu0 0
        %916 = vmatprep.subr.bf16.mxu0 0
        %917 = vmatpush1.bf16.msra.mxu0 %v898
        %918 = vmatprep.subr.bf16.mxu0 0
        %919 = vmatpush1.bf16.msra.mxu0 %v897
        %920 = vmatprep.subr.bf16.mxu0 0
        %921 = vmatpush2.bf16.msra.mxu0 0
        %922 = vmatprep.subr.bf16.mxu0 0
        %923 = vmatpush2.bf16.msra.mxu0 0
        %924 = vmatprep.subr.bf16.mxu0 0
        %925 = vmatpush2.bf16.msra.mxu0 0
        %926 = vmatprep.subr.bf16.mxu0 0
        %927 = vmatpush2.bf16.msra.mxu0 0
        %928 = vmatprep.subr.bf16.mxu0 0
        %929 = vmatpush2.bf16.msra.mxu0 0
        %930 = vmatprep.subr.bf16.mxu0 0
        %931 = vmatpush2.bf16.msra.mxu0 0
        %932 = vmatprep.subr.bf16.mxu0 0
        %933 = vmatpush2.bf16.msra.mxu0 0
        %934 = vmatprep.subr.bf16.mxu0 0
        %935 = vmatpush2.bf16.msra.mxu0 0
        %936 = vmatprep.mubr.bf16.mxu0 0
        %937 = vmatmul.mubr.bf16.gmra.mxu0 %v902
        %v938 = vpop.f32.mrf.mxu0
        %v939 = vadd.f32 %v884, %v938
        %v940 = vpop.f32.mrf.mxu0
        %v941 = vpop.f32.mrf.mxu0
        %v942 = vpop.f32.mrf.mxu0
        %943 = vdwg.mxu0
        %944 = vst [vmem:[%s451] sm:$0x3] %v939
        %s945 = sand.u32 %s234, 1
        %s946 = scalar_lea.sflag [#allocation4], %s945
        %s947 = sand.u32 %s234, 1
        %s948 = smul.addr %s947, 2
        %s949 = scalar_lea.vmem [#allocation11], %s948
        // Predicated region
        $region81: #{tpu_custom_call.1} parent=55 // pred_check
          %p950 = pneg %p244
        $region82: #{tpu_custom_call.1} parent=55 // pred_check_branch
          %952 = sbr.rel (%p950) target = $region84
        $region83: #{tpu_custom_call.1} parent=55 // pred_region
          %s954 = ssub.s32 32, 32
          %955 = vsyncadd %s946, %s954
          %s956 = smul.addr %s32, 32
          %s957 = scalar_lea.hbm %s9, %s956
          %s959 = sshll.u32 %s949, 4
          %s960 = int_to_ptr.vmem [resolvable:$true] %s959
          %962 = dma.vmem_to_hbm [thread:$0]  %s960, 32, %s957, %s946
        $region84: #{tpu_custom_call.1} parent=55 // pred_fallthru
          _
        // Predicated region
        $region85: #{tpu_custom_call.1} parent=55 // pred_check
          %p963 = pneg %p265
        $region86: #{tpu_custom_call.1} parent=55 // pred_check_branch
          %965 = sbr.rel (%p963) target = $region88
        $region87: #{tpu_custom_call.1} parent=55 // pred_region
          %s967 = ssub.s32 32, 32
          %968 = vsyncadd [#allocation13], %s967
          %s970 = sshll.u32 [#allocation12], 4
          %s971 = int_to_ptr.vmem [resolvable:$true] %s970
          %973 = dma.vmem_to_hbm [thread:$0]  %s971, 32, %s10, [#allocation13]
        $region88: #{tpu_custom_call.1} parent=55 // pred_fallthru
          _
        // Predicated region
        $region89: #{tpu_custom_call.1} parent=55 // pred_check
          %p974 = pneg %p286
        $region90: #{tpu_custom_call.1} parent=55 // pred_check_branch
          %976 = sbr.rel (%p974) target = $region92
        $region91: #{tpu_custom_call.1} parent=55 // pred_region
          %s978 = ssub.s32 32, 32
          %979 = vsyncadd [#allocation13], %s978
          %s981 = sshll.u32 [#allocation14], 4
          %s982 = int_to_ptr.vmem [resolvable:$true] %s981
          %984 = dma.vmem_to_hbm [thread:$0]  %s982, 32, %s11, [#allocation13]
        $region92: #{tpu_custom_call.1} parent=55 // pred_fallthru
          _
        // Predicated region
        $region93: #{tpu_custom_call.1} parent=55 // pred_check
          %p985 = pneg %p265
        $region94: #{tpu_custom_call.1} parent=55 // pred_check_branch
          %987 = sbr.rel (%p985) target = $region96
        $region95: #{tpu_custom_call.1} parent=55 // pred_region
          %988 = dma.done [#allocation13], 32
        $region96: #{tpu_custom_call.1} parent=55 // pred_fallthru
          _
        // Predicated region
        $region97: #{tpu_custom_call.1} parent=55 // pred_check
          %p989 = pneg %p286
        $region98: #{tpu_custom_call.1} parent=55 // pred_check_branch
          %991 = sbr.rel (%p989) target = $region100
        $region99: #{tpu_custom_call.1} parent=55 // pred_region
          %992 = dma.done [#allocation13], 32
        $region100: #{tpu_custom_call.1} parent=55 // pred_fallthru
          _
      $region56: #{tpu_custom_call.1} parent=5 // pred_fallthru
        _
      %p993 = scmp.le.s32.totalorder 2, %s27
      // Predicated region
      $region101: #{tpu_custom_call.1} parent=5 // pred_check
        %p994 = pneg %p993
      $region102: #{tpu_custom_call.1} parent=5 // pred_check_branch
        %996 = sbr.rel (%p994) target = $region104
      $region103: #{tpu_custom_call.1} parent=5 // pred_region
        %s997 = ssub.s32 %s27, 2
        // Predicated region
        $region105: #{tpu_custom_call.1} parent=103 // pred_check
          %p998 = pneg %p250
        $region106: #{tpu_custom_call.1} parent=103 // pred_check_branch
          %1000 = sbr.rel (%p998) target = $region108
        $region107: #{tpu_custom_call.1} parent=103 // pred_region
          %s1001 = sand.u32 %s235, 1
          %s1002 = scalar_lea.sflag [#allocation4], %s1001
          %s1003 = sand.u32 %s235, 1
          %s1004 = smul.addr %s1003, 2
          %s1005 = scalar_lea.vmem [#allocation11], %s1004
          %1006 = dma.done %s1002, 32
        $region108: #{tpu_custom_call.1} parent=103 // pred_fallthru
          _
      $region104: #{tpu_custom_call.1} parent=5 // pred_fallthru
        _
    $region6: #{tpu_custom_call.1} parent=1 // loop_footer
      %s31 = sadd.s32 1, %s27
    $region7: #{tpu_custom_call.1} parent=1 // loop_footer_branch
      %26 = sbr.rel target = $region3
    $region8: #{tpu_custom_call.1} parent=1 // loop_exit
      _
    %1007 = vsyncpa [#allocation3], 1
    %s1008 = scalar_lea.sflag [#allocation3], 1
    %1009 = vsyncpa %s1008, 1
    %1010 = vsyncpa [#allocation6], 1
    %1011 = vsyncpa [#allocation9], 1
    %1012 = vsyncpa [#allocation4], 1
    %s1013 = scalar_lea.sflag [#allocation4], 1
    %1014 = vsyncpa %s1013, 1
    %1015 = vsyncpa [#allocation13], 1

</llo_original>
